<compile_context>
chip_gen: v5e
topology: v5e:2x2
jax: 0.10.0
libtpu: 0.0.40
codegen_flags: <defaults>
</compile_context>

<pallas_src>
import jax
import jax.numpy as jnp
from jax import lax
from jax.experimental import pallas as pl
from jax.experimental.pallas import tpu as pltpu

EPS = 1e-12  # F.normalize default eps
EPS_SQ = EPS * EPS


def _netvlad_kernel(x_ref, w_ref, cen_ref, out_ref):
    # x_ref:   (BN, C, S)  raw descriptors, C on sublanes, S (=H*W) on lanes
    # w_ref:   (K, C)      1x1 conv weight (no bias, vladv2=False)
    # cen_ref: (K, C)      centroids
    # out_ref: (BN, K, C)  final (doubly L2-normalized) VLAD descriptors
    w = w_ref[...].astype(jnp.float32)        # (K, C)
    cen = cen_ref[...].astype(jnp.float32)    # (K, C)
    bn = x_ref.shape[0]

    for b in range(bn):                        # static unroll, BN is small
        x = x_ref[b].astype(jnp.float32)       # (C, S)

        # 1) descriptor-wise L2 normalization over channels (dim=1 in NCHW).
        #    x / max(||x||, eps) == x * rsqrt(max(||x||^2, eps^2))
        ssq = jnp.sum(x * x, axis=0, keepdims=True)          # (1, S)
        xn = x * lax.rsqrt(jnp.maximum(ssq, EPS_SQ))          # (C, S)

        # 2) 1x1 conv -> logits in lane-dense (K, S) layout, transpose-free:
        #    logits[k, s] = sum_c w[k, c] * xn[c, s]
        logits = jnp.dot(w, xn, preferred_element_type=jnp.float32)  # (K, S)
        # softmax over clusters (axis 0 = sublanes, only K rows)
        m = jnp.max(logits, axis=0, keepdims=True)            # (1, S)
        e = jnp.exp(logits - m)                                # (K, S)
        denom = jnp.sum(e, axis=0, keepdims=True)              # (1, S)
        a = e * pl.reciprocal(denom, approx=False)             # (K, S), EUP

        # 3) VLAD aggregation:
        #    vlad[k, c] = sum_s a[k, s] * (xn[c, s] - cen[k, c])
        #               = (a @ xn^T)[k, c] - cen[k, c] * sum_s a[k, s]
        av = lax.dot_general(
            a, xn, dimension_numbers=(((1,), (1,)), ((), ())),
            preferred_element_type=jnp.float32)                # (K, C)
        asum = jnp.sum(a, axis=1, keepdims=True)               # (K, 1)
        vlad = av - cen * asum                                 # (K, C)

        # 4) intra-normalization (L2 over C per cluster)
        n1 = jnp.sum(vlad * vlad, axis=1, keepdims=True)       # (K, 1)
        vlad = vlad * lax.rsqrt(jnp.maximum(n1, EPS_SQ))

        # 5) global L2 normalization over the flattened (K*C) descriptor
        n2 = jnp.sum(vlad * vlad, keepdims=True)               # (1, 1)
        vlad = vlad * lax.rsqrt(jnp.maximum(n2, EPS_SQ))

        out_ref[b] = vlad.astype(out_ref.dtype)


def netvlad_forward(x_nchw, conv_w, centroids, *, block_n=None):
    """x_nchw: (N, C, H, W); conv_w: (K, C); centroids: (K, C) -> (N, K*C)."""
    N, C, H, W = x_nchw.shape
    K = conv_w.shape[0]
    S = H * W

    # Free reshape (no HBM transpose): NCHW -> (N, C, S).
    x_ncs = x_nchw.reshape(N, C, S)

    # Fold several batch samples per grid step to amortize per-step overhead.
    if block_n is None:
        block_n = 1
        for cand in (8, 4, 2):
            if N % cand == 0:
                block_n = cand
                break
    assert N % block_n == 0
    grid = (N // block_n,)

    cost = pl.CostEstimate(
        flops=int(4 * N * S * C * K),                 # two (K,C,S) matmuls
        transcendentals=int(N * S * (K + 2) + N * K),  # exp + rsqrt/recip
        bytes_accessed=int(4 * (N * C * S + N * K * C + 2 * K * C)),
    )

    out = pl.pallas_call(
        _netvlad_kernel,
        out_shape=jax.ShapeDtypeStruct((N, K, C), x_nchw.dtype),
        grid_spec=pltpu.PrefetchScalarGridSpec(
            num_scalar_prefetch=0,
            grid=grid,
            in_specs=[
                pl.BlockSpec((block_n, C, S), lambda n: (n, 0, 0)),
                pl.BlockSpec((K, C), lambda n: (0, 0)),
                pl.BlockSpec((K, C), lambda n: (0, 0)),
            ],
            out_specs=pl.BlockSpec((block_n, K, C), lambda n: (n, 0, 0)),
        ),
        compiler_params=pltpu.CompilerParams(
            dimension_semantics=("parallel",)),
        cost_estimate=cost,
    )(x_ncs, conv_w, centroids)
    # glue: (N, K, C) -> (N, K*C); free reshape (K major, C minor).
    return out.reshape(N, K * C)


def netvlad_reference(x_nchw, conv_w, centroids):
    """Pure-JAX reference mirroring the PyTorch forward (for validation)."""
    N, C, H, W = x_nchw.shape
    K = conv_w.shape[0]
    S = H * W
    x = x_nchw / jnp.maximum(
        jnp.sqrt(jnp.sum(x_nchw * x_nchw, axis=1, keepdims=True)), EPS)
    xf = x.reshape(N, C, S)                                  # (N, C, S)
    logits = jnp.einsum("ncs,kc->nks", xf, conv_w)           # (N, K, S)
    a = jax.nn.softmax(logits, axis=1)                       # softmax over K
    vlad = jnp.einsum("nks,ncs->nkc", a, xf) \
        - centroids[None, :, :] * jnp.sum(a, axis=-1)[:, :, None]
    vlad = vlad / jnp.maximum(
        jnp.sqrt(jnp.sum(vlad * vlad, axis=2, keepdims=True)), EPS)
    vlad = vlad.reshape(N, K * C)
    vlad = vlad / jnp.maximum(
        jnp.sqrt(jnp.sum(vlad * vlad, axis=1, keepdims=True)), EPS)
    return vlad


if __name__ == "__main__":
    # Small, kernel-friendly shapes: dim(C)=128, num_clusters(K)=16, H=W=16,
    # N=4 so batch folding (BN=2) still leaves 2 grid steps.
    N, C, H, W, K = 4, 128, 16, 16, 16
    key = jax.random.PRNGKey(0)
    kx, kw, kc = jax.random.split(key, 3)

    x = jax.random.normal(kx, (N, C, H, W), dtype=jnp.float32)
    # nn.Conv2d(dim, K, 1, bias=False) weight (K, C, 1, 1) -> (K, C)
    conv_w = jax.random.uniform(kw, (K, C), dtype=jnp.float32,
                                minval=-(1.0 / C) ** 0.5, maxval=(1.0 / C) ** 0.5)
    # centroids = torch.rand(K, dim) -> uniform [0, 1)
    centroids = jax.random.uniform(kc, (K, C), dtype=jnp.float32)

    out = netvlad_forward(x, conv_w, centroids, block_n=2)
    out = jax.block_until_ready(out)

    ref = netvlad_reference(x, conv_w, centroids)
    assert out.shape == (N, K * C)
    assert jnp.max(jnp.abs(out - ref)) < 1e-5

    print("KERNEL_OK")
</pallas_src>

<mosaic_0001>
module attributes {stable_mosaic.version = 11 : i64} {
  func.func @_netvlad_kernel(%arg0: i32, %arg1: memref<2x128x256xf32, #tpu.memory_space<vmem>>, %arg2: memref<16x128xf32, #tpu.memory_space<vmem>>, %arg3: memref<16x128xf32, #tpu.memory_space<vmem>>, %arg4: memref<2x16x128xf32, #tpu.memory_space<vmem>>) attributes {dimension_semantics = [#tpu.dimension_semantics<parallel>], iteration_bounds = array<i64: 2>, scalar_prefetch = 0 : i64, scratch_operands = 0 : i64, tpu.core_type = #tpu.core_type<tc>, window_params = [{transform_indices = @transform_0, window_bounds = array<i64: 2, 128, 256>}, {pipeline_mode = #tpu.pipeline_mode<synchronous>, transform_indices = @transform_1, window_bounds = array<i64: 16, 128>}, {pipeline_mode = #tpu.pipeline_mode<synchronous>, transform_indices = @transform_2, window_bounds = array<i64: 16, 128>}, {transform_indices = @transform_3, window_bounds = array<i64: 2, 16, 128>}]} {
    %c0 = arith.constant 0 : index
    %c0_0 = arith.constant 0 : index
    %0 = vector.load %arg2[%c0, %c0_0] : memref<16x128xf32, #tpu.memory_space<vmem>>, vector<16x128xf32>
    %c0_1 = arith.constant 0 : index
    %c0_2 = arith.constant 0 : index
    %1 = vector.load %arg3[%c0_1, %c0_2] : memref<16x128xf32, #tpu.memory_space<vmem>>, vector<16x128xf32>
    %c0_3 = arith.constant 0 : index
    %c0_4 = arith.constant 0 : index
    %c0_5 = arith.constant 0 : index
    %2 = vector.load %arg1[%c0_3, %c0_4, %c0_5] : memref<2x128x256xf32, #tpu.memory_space<vmem>>, vector<1x128x256xf32>
    %3 = vector.shape_cast %2 : vector<1x128x256xf32> to vector<128x256xf32>
    %4 = arith.mulf %3, %3 : vector<128x256xf32>
    %cst = arith.constant dense<0.000000e+00> : vector<256xf32>
    %5 = vector.multi_reduction <add>, %4, %cst [0] : vector<128x256xf32> to vector<256xf32>
    %6 = vector.shape_cast %5 : vector<256xf32> to vector<1x256xf32>
    %cst_6 = arith.constant 1.000000e-24 : f32
    %7 = vector.broadcast %cst_6 : f32 to vector<1x256xf32>
    %8 = arith.maximumf %6, %7 : vector<1x256xf32>
    %9 = math.rsqrt %8 : vector<1x256xf32>
    %10 = vector.broadcast %9 : vector<1x256xf32> to vector<128x256xf32>
    %11 = arith.mulf %3, %10 : vector<128x256xf32>
    %cst_7 = arith.constant dense<0.000000e+00> : vector<16x256xf32>
    %12 = tpu.matmul %0, %11, %cst_7 {dimension_numbers = #tpu.dot_dimension_numbers<[1], [0], [0], [1], [0, 0, 1, 1], [], []>} : vector<16x128xf32>, vector<128x256xf32>, vector<16x256xf32> -> vector<16x256xf32>
    %cst_8 = arith.constant dense<0xFF800000> : vector<256xf32>
    %13 = vector.multi_reduction <maximumf>, %12, %cst_8 [0] : vector<16x256xf32> to vector<256xf32>
    %14 = vector.shape_cast %13 : vector<256xf32> to vector<1x256xf32>
    %15 = vector.broadcast %14 : vector<1x256xf32> to vector<16x256xf32>
    %16 = arith.subf %12, %15 : vector<16x256xf32>
    %17 = math.exp %16 : vector<16x256xf32>
    %cst_9 = arith.constant dense<0.000000e+00> : vector<256xf32>
    %18 = vector.multi_reduction <add>, %17, %cst_9 [0] : vector<16x256xf32> to vector<256xf32>
    %19 = vector.shape_cast %18 : vector<256xf32> to vector<1x256xf32>
    %20 = tpu.reciprocal %19 : vector<1x256xf32> -> vector<1x256xf32>
    %21 = vector.broadcast %20 : vector<1x256xf32> to vector<16x256xf32>
    %22 = arith.mulf %17, %21 : vector<16x256xf32>
    %cst_10 = arith.constant dense<0.000000e+00> : vector<16x128xf32>
    %23 = tpu.matmul %22, %11, %cst_10 {dimension_numbers = #tpu.dot_dimension_numbers<[1], [1], [0], [0], [0, 0, 1, 0], [], []>} : vector<16x256xf32>, vector<128x256xf32>, vector<16x128xf32> -> vector<16x128xf32>
    %cst_11 = arith.constant dense<0.000000e+00> : vector<16xf32>
    %24 = vector.multi_reduction <add>, %22, %cst_11 [1] : vector<16x256xf32> to vector<16xf32>
    %25 = vector.shape_cast %24 : vector<16xf32> to vector<16x1xf32>
    %26 = vector.broadcast %25 : vector<16x1xf32> to vector<16x128xf32>
    %27 = arith.mulf %1, %26 : vector<16x128xf32>
    %28 = arith.subf %23, %27 : vector<16x128xf32>
    %29 = arith.mulf %28, %28 : vector<16x128xf32>
    %cst_12 = arith.constant dense<0.000000e+00> : vector<16xf32>
    %30 = vector.multi_reduction <add>, %29, %cst_12 [1] : vector<16x128xf32> to vector<16xf32>
    %31 = vector.shape_cast %30 : vector<16xf32> to vector<16x1xf32>
    %cst_13 = arith.constant 1.000000e-24 : f32
    %32 = vector.broadcast %cst_13 : f32 to vector<16x1xf32>
    %33 = arith.maximumf %31, %32 : vector<16x1xf32>
    %34 = math.rsqrt %33 : vector<16x1xf32>
    %35 = vector.broadcast %34 : vector<16x1xf32> to vector<16x128xf32>
    %36 = arith.mulf %28, %35 : vector<16x128xf32>
    %37 = arith.mulf %36, %36 : vector<16x128xf32>
    %38 = vector.shape_cast %37 : vector<16x128xf32> to vector<1x16x128xf32>
    %cst_14 = arith.constant dense<0.000000e+00> : vector<1xf32>
    %39 = vector.multi_reduction <add>, %38, %cst_14 [1, 2] : vector<1x16x128xf32> to vector<1xf32>
    %40 = vector.shape_cast %39 : vector<1xf32> to vector<1x1x1xf32>
    %41 = vector.extract %40[0, 0, 0] : f32 from vector<1x1x1xf32>
    %42 = vector.broadcast %41 : f32 to vector<1x1xf32>
    %cst_15 = arith.constant 1.000000e-24 : f32
    %43 = vector.broadcast %cst_15 : f32 to vector<1x1xf32>
    %44 = arith.maximumf %42, %43 : vector<1x1xf32>
    %45 = math.rsqrt %44 : vector<1x1xf32>
    %46 = vector.broadcast %45 : vector<1x1xf32> to vector<16x128xf32>
    %47 = arith.mulf %36, %46 : vector<16x128xf32>
    %c0_16 = arith.constant 0 : index
    %c0_17 = arith.constant 0 : index
    %c0_18 = arith.constant 0 : index
    %48 = vector.load %arg4[%c0_16, %c0_17, %c0_18] : memref<2x16x128xf32, #tpu.memory_space<vmem>>, vector<1x16x128xf32>
    %49 = vector.shape_cast %48 : vector<1x16x128xf32> to vector<16x128xf32>
    %50 = vector.shape_cast %47 : vector<16x128xf32> to vector<1x16x128xf32>
    tpu.vector_store %arg4[%c0_16, %c0_17, %c0_18], %50 {strides = array<i32>} : memref<2x16x128xf32, #tpu.memory_space<vmem>>, vector<1x16x128xf32>,
    %c1 = arith.constant 1 : index
    %c0_19 = arith.constant 0 : index
    %c0_20 = arith.constant 0 : index
    %51 = vector.load %arg1[%c1, %c0_19, %c0_20] : memref<2x128x256xf32, #tpu.memory_space<vmem>>, vector<1x128x256xf32>
    %52 = vector.shape_cast %51 : vector<1x128x256xf32> to vector<128x256xf32>
    %53 = arith.mulf %52, %52 : vector<128x256xf32>
    %cst_21 = arith.constant dense<0.000000e+00> : vector<256xf32>
    %54 = vector.multi_reduction <add>, %53, %cst_21 [0] : vector<128x256xf32> to vector<256xf32>
    %55 = vector.shape_cast %54 : vector<256xf32> to vector<1x256xf32>
    %cst_22 = arith.constant 1.000000e-24 : f32
    %56 = vector.broadcast %cst_22 : f32 to vector<1x256xf32>
    %57 = arith.maximumf %55, %56 : vector<1x256xf32>
    %58 = math.rsqrt %57 : vector<1x256xf32>
    %59 = vector.broadcast %58 : vector<1x256xf32> to vector<128x256xf32>
    %60 = arith.mulf %52, %59 : vector<128x256xf32>
    %cst_23 = arith.constant dense<0.000000e+00> : vector<16x256xf32>
    %61 = tpu.matmul %0, %60, %cst_23 {dimension_numbers = #tpu.dot_dimension_numbers<[1], [0], [0], [1], [0, 0, 1, 1], [], []>} : vector<16x128xf32>, vector<128x256xf32>, vector<16x256xf32> -> vector<16x256xf32>
    %cst_24 = arith.constant dense<0xFF800000> : vector<256xf32>
    %62 = vector.multi_reduction <maximumf>, %61, %cst_24 [0] : vector<16x256xf32> to vector<256xf32>
    %63 = vector.shape_cast %62 : vector<256xf32> to vector<1x256xf32>
    %64 = vector.broadcast %63 : vector<1x256xf32> to vector<16x256xf32>
    %65 = arith.subf %61, %64 : vector<16x256xf32>
    %66 = math.exp %65 : vector<16x256xf32>
    %cst_25 = arith.constant dense<0.000000e+00> : vector<256xf32>
    %67 = vector.multi_reduction <add>, %66, %cst_25 [0] : vector<16x256xf32> to vector<256xf32>
    %68 = vector.shape_cast %67 : vector<256xf32> to vector<1x256xf32>
    %69 = tpu.reciprocal %68 : vector<1x256xf32> -> vector<1x256xf32>
    %70 = vector.broadcast %69 : vector<1x256xf32> to vector<16x256xf32>
    %71 = arith.mulf %66, %70 : vector<16x256xf32>
    %cst_26 = arith.constant dense<0.000000e+00> : vector<16x128xf32>
    %72 = tpu.matmul %71, %60, %cst_26 {dimension_numbers = #tpu.dot_dimension_numbers<[1], [1], [0], [0], [0, 0, 1, 0], [], []>} : vector<16x256xf32>, vector<128x256xf32>, vector<16x128xf32> -> vector<16x128xf32>
    %cst_27 = arith.constant dense<0.000000e+00> : vector<16xf32>
    %73 = vector.multi_reduction <add>, %71, %cst_27 [1] : vector<16x256xf32> to vector<16xf32>
    %74 = vector.shape_cast %73 : vector<16xf32> to vector<16x1xf32>
    %75 = vector.broadcast %74 : vector<16x1xf32> to vector<16x128xf32>
    %76 = arith.mulf %1, %75 : vector<16x128xf32>
    %77 = arith.subf %72, %76 : vector<16x128xf32>
    %78 = arith.mulf %77, %77 : vector<16x128xf32>
    %cst_28 = arith.constant dense<0.000000e+00> : vector<16xf32>
    %79 = vector.multi_reduction <add>, %78, %cst_28 [1] : vector<16x128xf32> to vector<16xf32>
    %80 = vector.shape_cast %79 : vector<16xf32> to vector<16x1xf32>
    %cst_29 = arith.constant 1.000000e-24 : f32
    %81 = vector.broadcast %cst_29 : f32 to vector<16x1xf32>
    %82 = arith.maximumf %80, %81 : vector<16x1xf32>
    %83 = math.rsqrt %82 : vector<16x1xf32>
    %84 = vector.broadcast %83 : vector<16x1xf32> to vector<16x128xf32>
    %85 = arith.mulf %77, %84 : vector<16x128xf32>
    %86 = arith.mulf %85, %85 : vector<16x128xf32>
    %87 = vector.shape_cast %86 : vector<16x128xf32> to vector<1x16x128xf32>
    %cst_30 = arith.constant dense<0.000000e+00> : vector<1xf32>
    %88 = vector.multi_reduction <add>, %87, %cst_30 [1, 2] : vector<1x16x128xf32> to vector<1xf32>
    %89 = vector.shape_cast %88 : vector<1xf32> to vector<1x1x1xf32>
    %90 = vector.extract %89[0, 0, 0] : f32 from vector<1x1x1xf32>
    %91 = vector.broadcast %90 : f32 to vector<1x1xf32>
    %cst_31 = arith.constant 1.000000e-24 : f32
    %92 = vector.broadcast %cst_31 : f32 to vector<1x1xf32>
    %93 = arith.maximumf %91, %92 : vector<1x1xf32>
    %94 = math.rsqrt %93 : vector<1x1xf32>
    %95 = vector.broadcast %94 : vector<1x1xf32> to vector<16x128xf32>
    %96 = arith.mulf %85, %95 : vector<16x128xf32>
    %c1_32 = arith.constant 1 : index
    %c0_33 = arith.constant 0 : index
    %c0_34 = arith.constant 0 : index
    %97 = vector.load %arg4[%c1_32, %c0_33, %c0_34] : memref<2x16x128xf32, #tpu.memory_space<vmem>>, vector<1x16x128xf32>
    %98 = vector.shape_cast %97 : vector<1x16x128xf32> to vector<16x128xf32>
    %99 = vector.shape_cast %96 : vector<16x128xf32> to vector<1x16x128xf32>
    tpu.vector_store %arg4[%c1_32, %c0_33, %c0_34], %99 {strides = array<i32>} : memref<2x16x128xf32, #tpu.memory_space<vmem>>, vector<1x16x128xf32>,
    return
  }
  func.func @transform_0(%arg0: i32) -> (i32, i32, i32) {
    %c0_i32 = arith.constant 0 : i32
    %c0_i32_0 = arith.constant 0 : i32
    %c0_i32_1 = arith.constant 0 : i32
    return %arg0, %c0_i32, %c0_i32_0 : i32, i32, i32
  }
  func.func @transform_1(%arg0: i32) -> (i32, i32) {
    %c0_i32 = arith.constant 0 : i32
    %c0_i32_0 = arith.constant 0 : i32
    %c0_i32_1 = arith.constant 0 : i32
    return %c0_i32, %c0_i32_0 : i32, i32
  }
  func.func @transform_2(%arg0: i32) -> (i32, i32) {
    %c0_i32 = arith.constant 0 : i32
    %c0_i32_0 = arith.constant 0 : i32
    %c0_i32_1 = arith.constant 0 : i32
    return %c0_i32, %c0_i32_0 : i32, i32
  }
  func.func @transform_3(%arg0: i32) -> (i32, i32, i32) {
    %c0_i32 = arith.constant 0 : i32
    %c0_i32_0 = arith.constant 0 : i32
    %c0_i32_1 = arith.constant 0 : i32
    return %arg0, %c0_i32, %c0_i32_0 : i32, i32, i32
  }
}

</mosaic_0001>

<llo_original>
// kernel: tpu_custom_call.1
$region0: #{tpu_custom_call.1}
  #allocation0 [shape = 'u32[]', space=smem, size = 0x4, offset = 0x4, fixed_abs, tag = 'smem constant byte address 0x4 - core index']
  #allocation1 [shape = 'u32[72,128]{1,0:T(1,128)}', space=vmem, size = 0x9000, scoped, tag = 'internal scratch']
  %s0 = inlined_call_operand.hbm [shape: f32[4,128,256], index: 0, kind: input, shape index: {}]
  %s1 = inlined_call_operand.hbm [shape: f32[16,128], index: 1, kind: input, shape index: {}]
  %s2 = inlined_call_operand.hbm [shape: f32[16,128], index: 2, kind: input, shape index: {}]
  %s3 = inlined_call_operand.hbm [shape: f32[4,16,128], index: 3, kind: output, shape index: {}]
  %s4 = sld [smem:[#allocation0]]
  $region57: #{tpu_custom_call.1} parent=0
    _
  %s6 = ssub.s32 1, %s4
  %s7 = scalar_select 0, %s6, %s4
  $region1: #{tpu_custom_call.1} parent=0
    #allocation2 [shape = 'u8[524288]{0}', space=vmem, size = 0x80000, scoped, tag = 'input window, operand 0']
    #allocation3 [shape = 's32[2]{0}', space=sflag, size = 0x8, scoped, tag = 'scoped memory for tpu_custom_call.1']
    #allocation4 [shape = 's32[2]{0}', space=sflag, size = 0x8, scoped, tag = 'scoped memory for tpu_custom_call.1']
    #allocation5 [shape = 'u8[8192]{0}', space=vmem, size = 0x2000, scoped, tag = 'input window, operand 1, single buffered']
    #allocation6 [shape = 's32[1]{0}', space=sflag, size = 0x4, scoped, tag = 'scoped memory for tpu_custom_call.1']
    #allocation7 [shape = 'u8[8192]{0}', space=vmem, size = 0x2000, scoped, tag = 'input window, operand 2, single buffered']
    #allocation8 [shape = 'u8[32768]{0}', space=vmem, size = 0x8000, scoped, tag = 'output window, operand 0']
    %8 = vsyncpa [#allocation3], 0
    %s9 = scalar_lea.sflag [#allocation3], 1
    %10 = vsyncpa %s9, 0
    %11 = vsyncpa [#allocation6], 0
    %12 = vsyncpa [#allocation4], 0
    %s13 = scalar_lea.sflag [#allocation4], 1
    %14 = vsyncpa %s13, 0
    loop: start=0, step=1, limit=4
    $region2: #{tpu_custom_call.1} parent=1 // loop_pre_header
      _
    $region3: #{tpu_custom_call.1} parent=1 // loop_header
      %s16 = sphi 0, %s20
      %p17 = scmp.ge.s32.totalorder %s16, 4
      %s26 = sphi 0, %s28
      %s29 = sphi 0, %s26
      %s30 = sphi 0, %s29
      %s46 = sphi 0, %s30
      %s50 = sphi 0, %s50
      %s52 = sphi 0, %s50
      %s53 = sphi 0, %s52
      %s67 = sphi 0, %s53
      %s71 = sphi 0, %s71
      %s73 = sphi 0, %s71
      %s74 = sphi 0, %s73
      %s88 = sphi 0, %s74
      %s94 = sphi 0, %s96
      %s97 = sphi 0, %s94
      %s98 = sphi 0, %s97
      %s114 = sphi 0, %s98
    $region4: #{tpu_custom_call.1} parent=1 // loop_header_branch
      %19 = sbr.rel (%p17) target = $region8
    $region5: #{tpu_custom_call.1} parent=1 // loop_body
      %s21 = ssub.s32 %s16, 1
      %s22 = ssub.s32 %s16, 2
      %s23 = sadd.s32 %s16, 1
      %s24 = ssub.s32 %s16, %s23
      %p25 = scmp.eq.s32.totalorder %s24, 0
      %s27 = sadd.s32 %s26, 1
      %s28 = scalar_select %p25, %s26, %s27
      %p31 = pneg %p25
      %p32 = scmp.eq.s32.totalorder %s16, 1
      %p33 = por %p31, %p32
      %p34 = scmp.ne.s32.totalorder %s26, %s29
      %p35 = scmp.eq.s32.totalorder %s16, 0
      %p36 = por %p34, %p35
      %p37 = scmp.ne.s32.totalorder %s26, %s29
      %p38 = scmp.eq.s32.totalorder %s21, 1
      %p39 = por %p37, %p38
      %p40 = scmp.ne.s32.totalorder %s29, %s30
      %p41 = scmp.eq.s32.totalorder %s21, 0
      %p42 = por %p40, %p41
      %p43 = scmp.ne.s32.totalorder %s29, %s30
      %p44 = scmp.eq.s32.totalorder %s22, 1
      %p45 = por %p43, %p44
      %p47 = scmp.ne.s32.totalorder %s30, %s46
      %p48 = scmp.eq.s32.totalorder %s22, 0
      %p49 = por %p47, %p48
      %s51 = sadd.s32 %s50, 1
      %p54 = scmp.eq.s32.totalorder %s16, 1
      %p55 = scmp.ne.s32.totalorder %s50, %s52
      %p56 = scmp.eq.s32.totalorder %s16, 0
      %p57 = por %p55, %p56
      %p58 = scmp.ne.s32.totalorder %s50, %s52
      %p59 = scmp.eq.s32.totalorder %s21, 1
      %p60 = por %p58, %p59
      %p61 = scmp.ne.s32.totalorder %s52, %s53
      %p62 = scmp.eq.s32.totalorder %s21, 0
      %p63 = por %p61, %p62
      %p64 = scmp.ne.s32.totalorder %s52, %s53
      %p65 = scmp.eq.s32.totalorder %s22, 1
      %p66 = por %p64, %p65
      %p68 = scmp.ne.s32.totalorder %s53, %s67
      %p69 = scmp.eq.s32.totalorder %s22, 0
      %p70 = por %p68, %p69
      %s72 = sadd.s32 %s71, 1
      %p75 = scmp.eq.s32.totalorder %s16, 1
      %p76 = scmp.ne.s32.totalorder %s71, %s73
      %p77 = scmp.eq.s32.totalorder %s16, 0
      %p78 = por %p76, %p77
      %p79 = scmp.ne.s32.totalorder %s71, %s73
      %p80 = scmp.eq.s32.totalorder %s21, 1
      %p81 = por %p79, %p80
      %p82 = scmp.ne.s32.totalorder %s73, %s74
      %p83 = scmp.eq.s32.totalorder %s21, 0
      %p84 = por %p82, %p83
      %p85 = scmp.ne.s32.totalorder %s73, %s74
      %p86 = scmp.eq.s32.totalorder %s22, 1
      %p87 = por %p85, %p86
      %p89 = scmp.ne.s32.totalorder %s74, %s88
      %p90 = scmp.eq.s32.totalorder %s22, 0
      %p91 = por %p89, %p90
      %s92 = ssub.s32 %s16, %s23
      %p93 = scmp.eq.s32.totalorder %s92, 0
      %s95 = sadd.s32 %s94, 1
      %s96 = scalar_select %p93, %s94, %s95
      %p99 = pneg %p93
      %p100 = scmp.eq.s32.totalorder %s16, 1
      %p101 = por %p99, %p100
      %p102 = scmp.ne.s32.totalorder %s94, %s97
      %p103 = scmp.eq.s32.totalorder %s16, 0
      %p104 = por %p102, %p103
      %p105 = scmp.ne.s32.totalorder %s94, %s97
      %p106 = scmp.eq.s32.totalorder %s21, 1
      %p107 = por %p105, %p106
      %p108 = scmp.ne.s32.totalorder %s97, %s98
      %p109 = scmp.eq.s32.totalorder %s21, 0
      %p110 = por %p108, %p109
      %p111 = scmp.ne.s32.totalorder %s97, %s98
      %p112 = scmp.eq.s32.totalorder %s22, 1
      %p113 = por %p111, %p112
      %p115 = scmp.ne.s32.totalorder %s98, %s114
      %p116 = scmp.eq.s32.totalorder %s22, 0
      %p117 = por %p115, %p116
      %p118 = scmp.le.s32.totalorder 1, %s16
      %p119 = scmp.lt.s32.totalorder %s16, 3
      %p120 = pnand %p118, %p119
      %p121 = pneg %p120
      // Predicated region
      $region9: #{tpu_custom_call.1} parent=5 // pred_check
        _
      $region10: #{tpu_custom_call.1} parent=5 // pred_check_branch
        %123 = sbr.rel (%p120) target = $region12
      $region11: #{tpu_custom_call.1} parent=5 // pred_region
        %s124 = ssub.s32 %s16, 1
        // Predicated region
        $region13: #{tpu_custom_call.1} parent=11 // pred_check
          %p125 = pneg %p63
        $region14: #{tpu_custom_call.1} parent=11 // pred_check_branch
          %127 = sbr.rel (%p125) target = $region16
        $region15: #{tpu_custom_call.1} parent=11 // pred_region
          %129 = vsyncadd [#allocation6], 0
          %s130 = sshll.u32 %s1, 4
          %s131 = int_to_ptr.hbm [resolvable:$true] %s130
          %s132 = sshll.u32 [#allocation5], 4
          %s133 = int_to_ptr.vmem [resolvable:$true] %s132
          %138 = dma.hbm_to_vmem [thread:$0]  %s131, 256, %s133, [#allocation6], 128, 128, 8
        $region16: #{tpu_custom_call.1} parent=11 // pred_fallthru
          _
        // Predicated region
        $region17: #{tpu_custom_call.1} parent=11 // pred_check
          %p139 = pneg %p84
        $region18: #{tpu_custom_call.1} parent=11 // pred_check_branch
          %141 = sbr.rel (%p139) target = $region20
        $region19: #{tpu_custom_call.1} parent=11 // pred_region
          %143 = vsyncadd [#allocation6], 0
          %s144 = sshll.u32 %s2, 4
          %s145 = int_to_ptr.hbm [resolvable:$true] %s144
          %s146 = sshll.u32 [#allocation7], 4
          %s147 = int_to_ptr.vmem [resolvable:$true] %s146
          %152 = dma.hbm_to_vmem [thread:$0]  %s145, 256, %s147, [#allocation6], 128, 128, 8
        $region20: #{tpu_custom_call.1} parent=11 // pred_fallthru
          _
      $region12: #{tpu_custom_call.1} parent=5 // pred_fallthru
        _
      %p153 = scmp.lt.s32.totalorder %s16, 2
      // Predicated region
      $region21: #{tpu_custom_call.1} parent=5 // pred_check
        %p154 = pneg %p153
      $region22: #{tpu_custom_call.1} parent=5 // pred_check_branch
        %156 = sbr.rel (%p154) target = $region24
      $region23: #{tpu_custom_call.1} parent=5 // pred_region
        // Predicated region
        $region25: #{tpu_custom_call.1} parent=23 // pred_check
          %p157 = pneg %p36
        $region26: #{tpu_custom_call.1} parent=23 // pred_check_branch
          %159 = sbr.rel (%p157) target = $region28
        $region27: #{tpu_custom_call.1} parent=23 // pred_region
          %s160 = sand.u32 %s26, 1
          %s161 = scalar_lea.sflag [#allocation3], %s160
          %s162 = sand.u32 %s26, 1
          %s163 = smul.addr %s162, 512
          %s164 = scalar_lea.vmem [#allocation2], %s163
          %s165 = smul.u32 2, %s16
          %167 = vsyncadd %s161, 0
          %s168 = smul.addr %s165, 32
          %s169 = smul.addr %s168, 8
          %s170 = scalar_lea.hbm %s0, %s169
          %s171 = sshll.u32 %s170, 4
          %s172 = int_to_ptr.hbm [resolvable:$true] %s171
          %s173 = sshll.u32 %s164, 4
          %s174 = int_to_ptr.vmem [resolvable:$true] %s173
          %179 = dma.hbm_to_vmem [thread:$0]  %s172, 8192, %s174, %s161, 256, 256, 16
        $region28: #{tpu_custom_call.1} parent=23 // pred_fallthru
          _
      $region24: #{tpu_custom_call.1} parent=5 // pred_fallthru
        _
      %p180 = scmp.le.s32.totalorder 1, %s16
      %p181 = scmp.lt.s32.totalorder %s16, 3
      %p182 = pnand %p180, %p181
      %p183 = pneg %p182
      // Predicated region
      $region29: #{tpu_custom_call.1} parent=5 // pred_check
        _
      $region30: #{tpu_custom_call.1} parent=5 // pred_check_branch
        %185 = sbr.rel (%p182) target = $region32
      $region31: #{tpu_custom_call.1} parent=5 // pred_region
        %s186 = ssub.s32 %s16, 1
        %s187 = sand.u32 %s29, 1
        %s188 = scalar_lea.sflag [#allocation3], %s187
        %s189 = sand.u32 %s29, 1
        %s190 = smul.addr %s189, 512
        %s191 = scalar_lea.vmem [#allocation2], %s190
        // Predicated region
        $region33: #{tpu_custom_call.1} parent=31 // pred_check
          %p192 = pneg %p42
        $region34: #{tpu_custom_call.1} parent=31 // pred_check_branch
          %194 = sbr.rel (%p192) target = $region36
        $region35: #{tpu_custom_call.1} parent=31 // pred_region
          %196 = dma.done %s188, 8192
        $region36: #{tpu_custom_call.1} parent=31 // pred_fallthru
          _
        // Predicated region
        $region37: #{tpu_custom_call.1} parent=31 // pred_check
          %p197 = pneg %p63
        $region38: #{tpu_custom_call.1} parent=31 // pred_check_branch
          %199 = sbr.rel (%p197) target = $region40
        $region39: #{tpu_custom_call.1} parent=31 // pred_region
          %201 = dma.done [#allocation6], 256
        $region40: #{tpu_custom_call.1} parent=31 // pred_fallthru
          _
        // Predicated region
        $region41: #{tpu_custom_call.1} parent=31 // pred_check
          %p202 = pneg %p84
        $region42: #{tpu_custom_call.1} parent=31 // pred_check_branch
          %204 = sbr.rel (%p202) target = $region44
        $region43: #{tpu_custom_call.1} parent=31 // pred_region
          %206 = dma.done [#allocation6], 256
        $region44: #{tpu_custom_call.1} parent=31 // pred_fallthru
          _
        %s207 = sand.u32 %s29, 1
        %s208 = scalar_lea.sflag [#allocation3], %s207
        %s209 = sand.u32 %s29, 1
        %s210 = smul.addr %s209, 512
        %s211 = scalar_lea.vmem [#allocation2], %s210
        %p212 = pneg %p42
        %p213 = pneg %p39
        %p214 = pneg %p63
        %p215 = pneg %p60
        %p216 = pneg %p84
        %p217 = pneg %p81
        %p218 = pneg %p110
        %p219 = pneg %p107
        %s220 = sand.u32 %s97, 1
        %s221 = scalar_lea.sflag [#allocation4], %s220
        %s222 = sand.u32 %s97, 1
        %s223 = smul.addr %s222, 32
        %s224 = scalar_lea.vmem [#allocation8], %s223
        %s225 = smul.u32 2, %s21
        %s226 = smul.u32 2, %s21
        %v227 = vld [vmem:[#allocation5] sm:$0xff]
        %v228 = vld [vmem:[#allocation5 + $0x8] sm:$0xff]
        %v229 = vld [vmem:[#allocation7] sm:$0xff]
        %v230 = vld [vmem:[#allocation7 + $0x8] sm:$0xff]
        %v231 = vld [vmem:[%s191] sm:$0xff]
        %v232 = vld [vmem:[%s191 + $0x8] sm:$0xff]
        %v233 = vld [vmem:[%s191 + $0x10] sm:$0xff]
        %v234 = vld [vmem:[%s191 + $0x18] sm:$0xff]
        %v235 = vld [vmem:[%s191 + $0x20] sm:$0xff]
        %v236 = vld [vmem:[%s191 + $0x28] sm:$0xff]
        %v237 = vld [vmem:[%s191 + $0x30] sm:$0xff]
        %v238 = vld [vmem:[%s191 + $0x38] sm:$0xff]
        %v239 = vld [vmem:[%s191 + $0x40] sm:$0xff]
        %v240 = vld [vmem:[%s191 + $0x48] sm:$0xff]
        %v241 = vld [vmem:[%s191 + $0x50] sm:$0xff]
        %v242 = vld [vmem:[%s191 + $0x58] sm:$0xff]
        %v243 = vld [vmem:[%s191 + $0x60] sm:$0xff]
        %v244 = vld [vmem:[%s191 + $0x68] sm:$0xff]
        %v245 = vld [vmem:[%s191 + $0x70] sm:$0xff]
        %v246 = vld [vmem:[%s191 + $0x78] sm:$0xff]
        %v247 = vld [vmem:[%s191 + $0x80] sm:$0xff]
        %v248 = vld [vmem:[%s191 + $0x88] sm:$0xff]
        %v249 = vld [vmem:[%s191 + $0x90] sm:$0xff]
        %v250 = vld [vmem:[%s191 + $0x98] sm:$0xff]
        %v251 = vld [vmem:[%s191 + $0xa0] sm:$0xff]
        %v252 = vld [vmem:[%s191 + $0xa8] sm:$0xff]
        %v253 = vld [vmem:[%s191 + $0xb0] sm:$0xff]
        %v254 = vld [vmem:[%s191 + $0xb8] sm:$0xff]
        %v255 = vld [vmem:[%s191 + $0xc0] sm:$0xff]
        %v256 = vld [vmem:[%s191 + $0xc8] sm:$0xff]
        %v257 = vld [vmem:[%s191 + $0xd0] sm:$0xff]
        %v258 = vld [vmem:[%s191 + $0xd8] sm:$0xff]
        %v259 = vld [vmem:[%s191 + $0xe0] sm:$0xff]
        %v260 = vld [vmem:[%s191 + $0xe8] sm:$0xff]
        %v261 = vld [vmem:[%s191 + $0xf0] sm:$0xff]
        %v262 = vld [vmem:[%s191 + $0xf8] sm:$0xff]
        %v263 = vmul.f32 %v231, %v231
        %v264 = vmul.f32 %v232, %v232
        %v265 = vmul.f32 %v233, %v233
        %v266 = vmul.f32 %v234, %v234
        %v267 = vmul.f32 %v235, %v235
        %v268 = vmul.f32 %v236, %v236
        %v269 = vmul.f32 %v237, %v237
        %v270 = vmul.f32 %v238, %v238
        %v271 = vmul.f32 %v239, %v239
        %v272 = vmul.f32 %v240, %v240
        %v273 = vmul.f32 %v241, %v241
        %v274 = vmul.f32 %v242, %v242
        %v275 = vmul.f32 %v243, %v243
        %v276 = vmul.f32 %v244, %v244
        %v277 = vmul.f32 %v245, %v245
        %v278 = vmul.f32 %v246, %v246
        %v279 = vmul.f32 %v247, %v247
        %v280 = vmul.f32 %v248, %v248
        %v281 = vmul.f32 %v249, %v249
        %v282 = vmul.f32 %v250, %v250
        %v283 = vmul.f32 %v251, %v251
        %v284 = vmul.f32 %v252, %v252
        %v285 = vmul.f32 %v253, %v253
        %v286 = vmul.f32 %v254, %v254
        %v287 = vmul.f32 %v255, %v255
        %v288 = vmul.f32 %v256, %v256
        %v289 = vmul.f32 %v257, %v257
        %v290 = vmul.f32 %v258, %v258
        %v291 = vmul.f32 %v259, %v259
        %v292 = vmul.f32 %v260, %v260
        %v293 = vmul.f32 %v261, %v261
        %v294 = vmul.f32 %v262, %v262
        %v295 = vadd.f32 %v263, %v265
        %v296 = vadd.f32 %v295, %v267
        %v297 = vadd.f32 %v296, %v269
        %v298 = vadd.f32 %v297, %v271
        %v299 = vadd.f32 %v298, %v273
        %v300 = vadd.f32 %v299, %v275
        %v301 = vadd.f32 %v300, %v277
        %v302 = vadd.f32 %v301, %v279
        %v303 = vadd.f32 %v302, %v281
        %v304 = vadd.f32 %v303, %v283
        %v305 = vadd.f32 %v304, %v285
        %v306 = vadd.f32 %v305, %v287
        %v307 = vadd.f32 %v306, %v289
        %v308 = vadd.f32 %v307, %v291
        %v309 = vadd.f32 %v308, %v293
        %v310 = vrot.slane %v309, 4
        %v311 = vadd.f32 %v309, %v310
        %v312 = vrot.slane %v311, 2
        %v313 = vadd.f32 %v311, %v312
        %v314 = vrot.slane %v313, 1
        %v315 = vadd.f32 %v313, %v314
        %v316 = vadd.f32 %v264, %v266
        %v317 = vadd.f32 %v316, %v268
        %v318 = vadd.f32 %v317, %v270
        %v319 = vadd.f32 %v318, %v272
        %v320 = vadd.f32 %v319, %v274
        %v321 = vadd.f32 %v320, %v276
        %v322 = vadd.f32 %v321, %v278
        %v323 = vadd.f32 %v322, %v280
        %v324 = vadd.f32 %v323, %v282
        %v325 = vadd.f32 %v324, %v284
        %v326 = vadd.f32 %v325, %v286
        %v327 = vadd.f32 %v326, %v288
        %v328 = vadd.f32 %v327, %v290
        %v329 = vadd.f32 %v328, %v292
        %v330 = vadd.f32 %v329, %v294
        %v331 = vrot.slane %v330, 4
        %v332 = vadd.f32 %v330, %v331
        %v333 = vrot.slane %v332, 2
        %v334 = vadd.f32 %v332, %v333
        %v335 = vrot.slane %v334, 1
        %v336 = vadd.f32 %v334, %v335
        %v337 = vmax.f32 %v315, 1e-24
        %v338 = vmax.f32 %v336, 1e-24
        %v339 = vrsqrt.pop %v337
        %v340 = vmul.f32 %v339, %v337
        %v341 = vmul.f32 %v340, %v339
        %v342 = vmul.f32 0.5, %v341
        %v343 = vsub.f32 1.5, %v342
        %v344 = vmul.f32 %v339, %v343
        %vm345 = vweird.f32 %v337
        %vm346 = vweird.f32 %v339
        %vm347 = vmor %vm345, %vm346
        %v348 = vsel %vm347, %v339, %v344
        %v349 = vrsqrt.pop %v338
        %v350 = vmul.f32 %v349, %v338
        %v351 = vmul.f32 %v350, %v349
        %v352 = vmul.f32 0.5, %v351
        %v353 = vsub.f32 1.5, %v352
        %v354 = vmul.f32 %v349, %v353
        %vm355 = vweird.f32 %v338
        %vm356 = vweird.f32 %v349
        %vm357 = vmor %vm355, %vm356
        %v358 = vsel %vm357, %v349, %v354
        %v359 = vmul.f32 %v231, %v348
        %v360 = vmul.f32 %v232, %v358
        %v361 = vmul.f32 %v233, %v348
        %v362 = vmul.f32 %v234, %v358
        %v363 = vmul.f32 %v235, %v348
        %v364 = vmul.f32 %v236, %v358
        %v365 = vmul.f32 %v237, %v348
        %v366 = vmul.f32 %v238, %v358
        %v367 = vmul.f32 %v239, %v348
        %v368 = vmul.f32 %v240, %v358
        %v369 = vmul.f32 %v241, %v348
        %v370 = vmul.f32 %v242, %v358
        %v371 = vmul.f32 %v243, %v348
        %v372 = vmul.f32 %v244, %v358
        %v373 = vmul.f32 %v245, %v348
        %v374 = vmul.f32 %v246, %v358
        %v375 = vmul.f32 %v247, %v348
        %v376 = vmul.f32 %v248, %v358
        %v377 = vmul.f32 %v249, %v348
        %v378 = vmul.f32 %v250, %v358
        %v379 = vmul.f32 %v251, %v348
        %v380 = vmul.f32 %v252, %v358
        %v381 = vmul.f32 %v253, %v348
        %v382 = vmul.f32 %v254, %v358
        %v383 = vmul.f32 %v255, %v348
        %v384 = vmul.f32 %v256, %v358
        %v385 = vmul.f32 %v257, %v348
        %v386 = vmul.f32 %v258, %v358
        %v387 = vmul.f32 %v259, %v348
        %v388 = vmul.f32 %v260, %v358
        %v389 = vmul.f32 %v261, %v348
        %v390 = vmul.f32 %v262, %v358
        %391 = vmatpush.msra.mxu0 %v389
        %392 = vmatpush.msra.mxu0 %v387
        %393 = vmatpush.msra.mxu0 %v385
        %394 = vmatpush.msra.mxu0 %v383
        %395 = vmatpush.msra.mxu0 %v381
        %396 = vmatpush.msra.mxu0 %v379
        %397 = vmatpush.msra.mxu0 %v377
        %398 = vmatpush.msra.mxu0 %v375
        %399 = vmatpush.msra.mxu0 %v373
        %400 = vmatpush.msra.mxu0 %v371
        %401 = vmatpush.msra.mxu0 %v369
        %402 = vmatpush.msra.mxu0 %v367
        %403 = vmatpush.msra.mxu0 %v365
        %404 = vmatpush.msra.mxu0 %v363
        %405 = vmatpush.msra.mxu0 %v361
        %406 = vmatpush.msra.mxu0 %v359
        %407 = vmatmul.f32.gmra.mxu0 %v227
        %v408 = vpop.f32.mrf.mxu0
        %v409 = vadd.f32 0.0, %v408
        %410 = vmatmul.f32.gmra.mxu0 %v228
        %v411 = vpop.f32.mrf.mxu0
        %v412 = vadd.f32 0.0, %v411
        %413 = vdwg.mxu0
        %414 = vmatpush.msra.mxu0 %v390
        %415 = vmatpush.msra.mxu0 %v388
        %416 = vmatpush.msra.mxu0 %v386
        %417 = vmatpush.msra.mxu0 %v384
        %418 = vmatpush.msra.mxu0 %v382
        %419 = vmatpush.msra.mxu0 %v380
        %420 = vmatpush.msra.mxu0 %v378
        %421 = vmatpush.msra.mxu0 %v376
        %422 = vmatpush.msra.mxu0 %v374
        %423 = vmatpush.msra.mxu0 %v372
        %424 = vmatpush.msra.mxu0 %v370
        %425 = vmatpush.msra.mxu0 %v368
        %426 = vmatpush.msra.mxu0 %v366
        %427 = vmatpush.msra.mxu0 %v364
        %428 = vmatpush.msra.mxu0 %v362
        %429 = vmatpush.msra.mxu0 %v360
        %430 = vmatmul.f32.gmra.mxu0 %v227
        %v431 = vpop.f32.mrf.mxu0
        %v432 = vadd.f32 0.0, %v431
        %433 = vmatmul.f32.gmra.mxu0 %v228
        %v434 = vpop.f32.mrf.mxu0
        %v435 = vadd.f32 0.0, %v434
        %436 = vdwg.mxu0
        %v437 = vmax.f32 %v409, %v412
        %v438 = vrot.slane %v437, 4
        %v439 = vmax.f32 %v437, %v438
        %v440 = vrot.slane %v439, 2
        %v441 = vmax.f32 %v439, %v440
        %v442 = vrot.slane %v441, 1
        %v443 = vmax.f32 %v441, %v442
        %v444 = vmax.f32 %v432, %v435
        %v445 = vrot.slane %v444, 4
        %v446 = vmax.f32 %v444, %v445
        %v447 = vrot.slane %v446, 2
        %v448 = vmax.f32 %v446, %v447
        %v449 = vrot.slane %v448, 1
        %v450 = vmax.f32 %v448, %v449
        %v451 = vsub.f32 %v409, %v443
        %v452 = vsub.f32 %v432, %v450
        %v453 = vsub.f32 %v412, %v443
        %v454 = vsub.f32 %v435, %v450
        %v455 = vmul.f32 %v451, 1.442695
        %v456 = vpow.pop %v455
        %v457 = vmul.f32 %v452, 1.442695
        %v458 = vpow.pop %v457
        %v459 = vmul.f32 %v453, 1.442695
        %v460 = vpow.pop %v459
        %v461 = vmul.f32 %v454, 1.442695
        %v462 = vpow.pop %v461
        %v463 = vadd.f32 %v456, %v460
        %v464 = vrot.slane %v463, 4
        %v465 = vadd.f32 %v463, %v464
        %v466 = vrot.slane %v465, 2
        %v467 = vadd.f32 %v465, %v466
        %v468 = vrot.slane %v467, 1
        %v469 = vadd.f32 %v467, %v468
        %v470 = vadd.f32 %v458, %v462
        %v471 = vrot.slane %v470, 4
        %v472 = vadd.f32 %v470, %v471
        %v473 = vrot.slane %v472, 2
        %v474 = vadd.f32 %v472, %v473
        %v475 = vrot.slane %v474, 1
        %v476 = vadd.f32 %v474, %v475
        %v477 = vrcp.pop %v469
        %v478 = vmul.f32 %v469, %v477
        %v479 = vsub.f32 1.0, %v478
        %v480 = vmul.f32 %v477, %v479
        %v481 = vadd.f32 %v477, %v480
        %vm482 = vweird.f32 %v469
        %vm483 = vweird.f32 %v477
        %vm484 = vmor %vm482, %vm483
        %v485 = vsel %vm484, %v477, %v481
        %v486 = vand.u32 2147483647, %v469
        %vm487 = vcmp.eq.f32.partialorder %v486, 8.507059e+37
        %v488 = vand.u32 %v469, 2147483648
        %v489 = vor.u32 1.1754944e-38, %v488
        %v490 = vsel %vm487, %v489, %v485
        %v491 = vrcp.pop %v476
        %v492 = vmul.f32 %v476, %v491
        %v493 = vsub.f32 1.0, %v492
        %v494 = vmul.f32 %v491, %v493
        %v495 = vadd.f32 %v491, %v494
        %vm496 = vweird.f32 %v476
        %vm497 = vweird.f32 %v491
        %vm498 = vmor %vm496, %vm497
        %v499 = vsel %vm498, %v491, %v495
        %v500 = vand.u32 2147483647, %v476
        %vm501 = vcmp.eq.f32.partialorder %v500, 8.507059e+37
        %v502 = vand.u32 %v476, 2147483648
        %v503 = vor.u32 1.1754944e-38, %v502
        %v504 = vsel %vm501, %v503, %v499
        %v505 = vmul.f32 %v456, %v490
        %v506 = vmul.f32 %v458, %v504
        %v507 = vmul.f32 %v460, %v490
        %v508 = vmul.f32 %v462, %v504
        %509 = vmatpush.xpose.msra.mxu0 %v389
        %510 = vmatpush.xpose.msra.mxu0 %v387
        %511 = vmatpush.xpose.msra.mxu0 %v385
        %512 = vmatpush.xpose.msra.mxu0 %v383
        %513 = vmatpush.xpose.msra.mxu0 %v381
        %514 = vmatpush.xpose.msra.mxu0 %v379
        %515 = vmatpush.xpose.msra.mxu0 %v377
        %516 = vmatpush.xpose.msra.mxu0 %v375
        %517 = vmatpush.xpose.msra.mxu0 %v373
        %518 = vmatpush.xpose.msra.mxu0 %v371
        %519 = vmatpush.xpose.msra.mxu0 %v369
        %520 = vmatpush.xpose.msra.mxu0 %v367
        %521 = vmatpush.xpose.msra.mxu0 %v365
        %522 = vmatpush.xpose.msra.mxu0 %v363
        %523 = vmatpush.xpose.msra.mxu0 %v361
        %524 = vmatpush.xpose.msra.mxu0 %v359
        %525 = vmatmul.f32.gmra.mxu0 %v505
        %v526 = vpop.f32.mrf.mxu0
        %v527 = vadd.f32 0.0, %v526
        %528 = vmatmul.f32.gmra.mxu0 %v507
        %v529 = vpop.f32.mrf.mxu0
        %v530 = vadd.f32 0.0, %v529
        %531 = vdwg.mxu0
        %532 = vmatpush.xpose.msra.mxu0 %v390
        %533 = vmatpush.xpose.msra.mxu0 %v388
        %534 = vmatpush.xpose.msra.mxu0 %v386
        %535 = vmatpush.xpose.msra.mxu0 %v384
        %536 = vmatpush.xpose.msra.mxu0 %v382
        %537 = vmatpush.xpose.msra.mxu0 %v380
        %538 = vmatpush.xpose.msra.mxu0 %v378
        %539 = vmatpush.xpose.msra.mxu0 %v376
        %540 = vmatpush.xpose.msra.mxu0 %v374
        %541 = vmatpush.xpose.msra.mxu0 %v372
        %542 = vmatpush.xpose.msra.mxu0 %v370
        %543 = vmatpush.xpose.msra.mxu0 %v368
        %544 = vmatpush.xpose.msra.mxu0 %v366
        %545 = vmatpush.xpose.msra.mxu0 %v364
        %546 = vmatpush.xpose.msra.mxu0 %v362
        %547 = vmatpush.xpose.msra.mxu0 %v360
        %548 = vmatmul.f32.gmra.mxu0 %v506
        %v549 = vpop.f32.mrf.mxu0
        %v550 = vadd.f32 %v527, %v549
        %551 = vmatmul.f32.gmra.mxu0 %v508
        %v552 = vpop.f32.mrf.mxu0
        %v553 = vadd.f32 %v530, %v552
        %554 = vdwg.mxu0
        %v555 = vadd.f32 %v505, %v506
        %556 = vadd.xlane.f32.xlu0 %v555
        %v557 = vpop.xlane.xlu0 %556
        %v558 = vadd.f32 %v507, %v508
        %559 = vadd.xlane.f32.xlu0 %v558
        %v560 = vpop.xlane.xlu0 %559
        %v561 = vmul.f32 %v229, %v557
        %v562 = vmul.f32 %v230, %v560
        %v563 = vsub.f32 %v550, %v561
        %v564 = vsub.f32 %v553, %v562
        %v565 = vmul.f32 %v563, %v563
        %v566 = vmul.f32 %v564, %v564
        %567 = vadd.xlane.f32.xlu0 %v565
        %v568 = vpop.xlane.xlu0 %567
        %569 = vadd.xlane.f32.xlu0 %v566
        %v570 = vpop.xlane.xlu0 %569
        %v571 = vmax.f32 %v568, 1e-24
        %v572 = vmax.f32 %v570, 1e-24
        %v573 = vrsqrt.pop %v571
        %v574 = vmul.f32 %v573, %v571
        %v575 = vmul.f32 %v574, %v573
        %v576 = vmul.f32 0.5, %v575
        %v577 = vsub.f32 1.5, %v576
        %v578 = vmul.f32 %v573, %v577
        %vm579 = vweird.f32 %v571
        %vm580 = vweird.f32 %v573
        %vm581 = vmor %vm579, %vm580
        %v582 = vsel %vm581, %v573, %v578
        %v583 = vrsqrt.pop %v572
        %v584 = vmul.f32 %v583, %v572
        %v585 = vmul.f32 %v584, %v583
        %v586 = vmul.f32 0.5, %v585
        %v587 = vsub.f32 1.5, %v586
        %v588 = vmul.f32 %v583, %v587
        %vm589 = vweird.f32 %v572
        %vm590 = vweird.f32 %v583
        %vm591 = vmor %vm589, %vm590
        %v592 = vsel %vm591, %v583, %v588
        %v593 = vmul.f32 %v563, %v582
        %v594 = vmul.f32 %v564, %v592
        %v595 = vmul.f32 %v593, %v593
        %v596 = vmul.f32 %v594, %v594
        %v597 = vadd.f32 %v595, %v596
        %598 = vadd.xlane.f32.xlu0 %v597
        %v599 = vpop.xlane.xlu0 %598
        %v600 = vrot.slane %v599, 4
        %v601 = vadd.f32 %v599, %v600
        %v602 = vrot.slane %v601, 2
        %v603 = vadd.f32 %v601, %v602
        %v604 = vrot.slane %v603, 1
        %v605 = vadd.f32 %v603, %v604
        %s606 = vtos %v605
        %v607 = vstv %s606
        %v608 = vmax.f32 %v607, 1e-24
        %v609 = vrsqrt.pop %v608
        %v610 = vmul.f32 %v609, %v608
        %v611 = vmul.f32 %v610, %v609
        %v612 = vmul.f32 0.5, %v611
        %v613 = vsub.f32 1.5, %v612
        %v614 = vmul.f32 %v609, %v613
        %vm615 = vweird.f32 %v608
        %vm616 = vweird.f32 %v609
        %vm617 = vmor %vm615, %vm616
        %v618 = vsel %vm617, %v609, %v614
        %v619 = vmul.f32 %v593, %v618
        %v620 = vmul.f32 %v594, %v618
        %621 = vst [vmem:[%s224] sm:$0xff] %v619
        %622 = vst [vmem:[%s224 + $0x8] sm:$0xff] %v620
        %s623 = scalar_lea.vmem %s191, 256 [#allocation2]
        %v624 = vld [vmem:[%s623] sm:$0xff]
        %v625 = vld [vmem:[%s623 + $0x8] sm:$0xff]
        %v626 = vld [vmem:[%s623 + $0x10] sm:$0xff]
        %v627 = vld [vmem:[%s623 + $0x18] sm:$0xff]
        %v628 = vld [vmem:[%s623 + $0x20] sm:$0xff]
        %v629 = vld [vmem:[%s623 + $0x28] sm:$0xff]
        %v630 = vld [vmem:[%s623 + $0x30] sm:$0xff]
        %v631 = vld [vmem:[%s623 + $0x38] sm:$0xff]
        %v632 = vld [vmem:[%s623 + $0x40] sm:$0xff]
        %v633 = vld [vmem:[%s623 + $0x48] sm:$0xff]
        %v634 = vld [vmem:[%s623 + $0x50] sm:$0xff]
        %v635 = vld [vmem:[%s623 + $0x58] sm:$0xff]
        %v636 = vld [vmem:[%s623 + $0x60] sm:$0xff]
        %v637 = vld [vmem:[%s623 + $0x68] sm:$0xff]
        %v638 = vld [vmem:[%s623 + $0x70] sm:$0xff]
        %v639 = vld [vmem:[%s623 + $0x78] sm:$0xff]
        %v640 = vld [vmem:[%s623 + $0x80] sm:$0xff]
        %v641 = vld [vmem:[%s623 + $0x88] sm:$0xff]
        %v642 = vld [vmem:[%s623 + $0x90] sm:$0xff]
        %v643 = vld [vmem:[%s623 + $0x98] sm:$0xff]
        %v644 = vld [vmem:[%s623 + $0xa0] sm:$0xff]
        %v645 = vld [vmem:[%s623 + $0xa8] sm:$0xff]
        %v646 = vld [vmem:[%s623 + $0xb0] sm:$0xff]
        %v647 = vld [vmem:[%s623 + $0xb8] sm:$0xff]
        %v648 = vld [vmem:[%s623 + $0xc0] sm:$0xff]
        %v649 = vld [vmem:[%s623 + $0xc8] sm:$0xff]
        %v650 = vld [vmem:[%s623 + $0xd0] sm:$0xff]
        %v651 = vld [vmem:[%s623 + $0xd8] sm:$0xff]
        %v652 = vld [vmem:[%s623 + $0xe0] sm:$0xff]
        %v653 = vld [vmem:[%s623 + $0xe8] sm:$0xff]
        %v654 = vld [vmem:[%s623 + $0xf0] sm:$0xff]
        %v655 = vld [vmem:[%s623 + $0xf8] sm:$0xff]
        %v656 = vmul.f32 %v624, %v624
        %v657 = vmul.f32 %v625, %v625
        %v658 = vmul.f32 %v626, %v626
        %v659 = vmul.f32 %v627, %v627
        %v660 = vmul.f32 %v628, %v628
        %v661 = vmul.f32 %v629, %v629
        %v662 = vmul.f32 %v630, %v630
        %v663 = vmul.f32 %v631, %v631
        %v664 = vmul.f32 %v632, %v632
        %v665 = vmul.f32 %v633, %v633
        %v666 = vmul.f32 %v634, %v634
        %v667 = vmul.f32 %v635, %v635
        %v668 = vmul.f32 %v636, %v636
        %v669 = vmul.f32 %v637, %v637
        %v670 = vmul.f32 %v638, %v638
        %v671 = vmul.f32 %v639, %v639
        %v672 = vmul.f32 %v640, %v640
        %v673 = vmul.f32 %v641, %v641
        %v674 = vmul.f32 %v642, %v642
        %v675 = vmul.f32 %v643, %v643
        %v676 = vmul.f32 %v644, %v644
        %v677 = vmul.f32 %v645, %v645
        %v678 = vmul.f32 %v646, %v646
        %v679 = vmul.f32 %v647, %v647
        %v680 = vmul.f32 %v648, %v648
        %v681 = vmul.f32 %v649, %v649
        %v682 = vmul.f32 %v650, %v650
        %v683 = vmul.f32 %v651, %v651
        %v684 = vmul.f32 %v652, %v652
        %v685 = vmul.f32 %v653, %v653
        %v686 = vmul.f32 %v654, %v654
        %v687 = vmul.f32 %v655, %v655
        %v688 = vadd.f32 %v656, %v658
        %v689 = vadd.f32 %v688, %v660
        %v690 = vadd.f32 %v689, %v662
        %v691 = vadd.f32 %v690, %v664
        %v692 = vadd.f32 %v691, %v666
        %v693 = vadd.f32 %v692, %v668
        %v694 = vadd.f32 %v693, %v670
        %v695 = vadd.f32 %v694, %v672
        %v696 = vadd.f32 %v695, %v674
        %v697 = vadd.f32 %v696, %v676
        %v698 = vadd.f32 %v697, %v678
        %v699 = vadd.f32 %v698, %v680
        %v700 = vadd.f32 %v699, %v682
        %v701 = vadd.f32 %v700, %v684
        %v702 = vadd.f32 %v701, %v686
        %v703 = vrot.slane %v702, 4
        %v704 = vadd.f32 %v702, %v703
        %v705 = vrot.slane %v704, 2
        %v706 = vadd.f32 %v704, %v705
        %v707 = vrot.slane %v706, 1
        %v708 = vadd.f32 %v706, %v707
        %v709 = vadd.f32 %v657, %v659
        %v710 = vadd.f32 %v709, %v661
        %v711 = vadd.f32 %v710, %v663
        %v712 = vadd.f32 %v711, %v665
        %v713 = vadd.f32 %v712, %v667
        %v714 = vadd.f32 %v713, %v669
        %v715 = vadd.f32 %v714, %v671
        %v716 = vadd.f32 %v715, %v673
        %v717 = vadd.f32 %v716, %v675
        %v718 = vadd.f32 %v717, %v677
        %v719 = vadd.f32 %v718, %v679
        %v720 = vadd.f32 %v719, %v681
        %v721 = vadd.f32 %v720, %v683
        %v722 = vadd.f32 %v721, %v685
        %v723 = vadd.f32 %v722, %v687
        %v724 = vrot.slane %v723, 4
        %v725 = vadd.f32 %v723, %v724
        %v726 = vrot.slane %v725, 2
        %v727 = vadd.f32 %v725, %v726
        %v728 = vrot.slane %v727, 1
        %v729 = vadd.f32 %v727, %v728
        %v730 = vmax.f32 %v708, 1e-24
        %v731 = vmax.f32 %v729, 1e-24
        %v732 = vrsqrt.pop %v730
        %v733 = vmul.f32 %v732, %v730
        %v734 = vmul.f32 %v733, %v732
        %v735 = vmul.f32 0.5, %v734
        %v736 = vsub.f32 1.5, %v735
        %v737 = vmul.f32 %v732, %v736
        %vm738 = vweird.f32 %v730
        %vm739 = vweird.f32 %v732
        %vm740 = vmor %vm738, %vm739
        %v741 = vsel %vm740, %v732, %v737
        %v742 = vrsqrt.pop %v731
        %v743 = vmul.f32 %v742, %v731
        %v744 = vmul.f32 %v743, %v742
        %v745 = vmul.f32 0.5, %v744
        %v746 = vsub.f32 1.5, %v745
        %v747 = vmul.f32 %v742, %v746
        %vm748 = vweird.f32 %v731
        %vm749 = vweird.f32 %v742
        %vm750 = vmor %vm748, %vm749
        %v751 = vsel %vm750, %v742, %v747
        %v752 = vmul.f32 %v624, %v741
        %v753 = vmul.f32 %v625, %v751
        %v754 = vmul.f32 %v626, %v741
        %v755 = vmul.f32 %v627, %v751
        %v756 = vmul.f32 %v628, %v741
        %v757 = vmul.f32 %v629, %v751
        %v758 = vmul.f32 %v630, %v741
        %v759 = vmul.f32 %v631, %v751
        %v760 = vmul.f32 %v632, %v741
        %v761 = vmul.f32 %v633, %v751
        %v762 = vmul.f32 %v634, %v741
        %v763 = vmul.f32 %v635, %v751
        %v764 = vmul.f32 %v636, %v741
        %v765 = vmul.f32 %v637, %v751
        %v766 = vmul.f32 %v638, %v741
        %v767 = vmul.f32 %v639, %v751
        %v768 = vmul.f32 %v640, %v741
        %v769 = vmul.f32 %v641, %v751
        %v770 = vmul.f32 %v642, %v741
        %v771 = vmul.f32 %v643, %v751
        %v772 = vmul.f32 %v644, %v741
        %v773 = vmul.f32 %v645, %v751
        %v774 = vmul.f32 %v646, %v741
        %v775 = vmul.f32 %v647, %v751
        %v776 = vmul.f32 %v648, %v741
        %v777 = vmul.f32 %v649, %v751
        %v778 = vmul.f32 %v650, %v741
        %v779 = vmul.f32 %v651, %v751
        %v780 = vmul.f32 %v652, %v741
        %v781 = vmul.f32 %v653, %v751
        %v782 = vmul.f32 %v654, %v741
        %v783 = vmul.f32 %v655, %v751
        %784 = vmatpush.msra.mxu0 %v782
        %785 = vmatpush.msra.mxu0 %v780
        %786 = vmatpush.msra.mxu0 %v778
        %787 = vmatpush.msra.mxu0 %v776
        %788 = vmatpush.msra.mxu0 %v774
        %789 = vmatpush.msra.mxu0 %v772
        %790 = vmatpush.msra.mxu0 %v770
        %791 = vmatpush.msra.mxu0 %v768
        %792 = vmatpush.msra.mxu0 %v766
        %793 = vmatpush.msra.mxu0 %v764
        %794 = vmatpush.msra.mxu0 %v762
        %795 = vmatpush.msra.mxu0 %v760
        %796 = vmatpush.msra.mxu0 %v758
        %797 = vmatpush.msra.mxu0 %v756
        %798 = vmatpush.msra.mxu0 %v754
        %799 = vmatpush.msra.mxu0 %v752
        %800 = vmatmul.f32.gmra.mxu0 %v227
        %v801 = vpop.f32.mrf.mxu0
        %v802 = vadd.f32 0.0, %v801
        %803 = vmatmul.f32.gmra.mxu0 %v228
        %v804 = vpop.f32.mrf.mxu0
        %v805 = vadd.f32 0.0, %v804
        %806 = vdwg.mxu0
        %807 = vmatpush.msra.mxu0 %v783
        %808 = vmatpush.msra.mxu0 %v781
        %809 = vmatpush.msra.mxu0 %v779
        %810 = vmatpush.msra.mxu0 %v777
        %811 = vmatpush.msra.mxu0 %v775
        %812 = vmatpush.msra.mxu0 %v773
        %813 = vmatpush.msra.mxu0 %v771
        %814 = vmatpush.msra.mxu0 %v769
        %815 = vmatpush.msra.mxu0 %v767
        %816 = vmatpush.msra.mxu0 %v765
        %817 = vmatpush.msra.mxu0 %v763
        %818 = vmatpush.msra.mxu0 %v761
        %819 = vmatpush.msra.mxu0 %v759
        %820 = vmatpush.msra.mxu0 %v757
        %821 = vmatpush.msra.mxu0 %v755
        %822 = vmatpush.msra.mxu0 %v753
        %823 = vmatmul.f32.gmra.mxu0 %v227
        %v824 = vpop.f32.mrf.mxu0
        %v825 = vadd.f32 0.0, %v824
        %826 = vmatmul.f32.gmra.mxu0 %v228
        %v827 = vpop.f32.mrf.mxu0
        %v828 = vadd.f32 0.0, %v827
        %829 = vdwg.mxu0
        %v830 = vmax.f32 %v802, %v805
        %v831 = vrot.slane %v830, 4
        %v832 = vmax.f32 %v830, %v831
        %v833 = vrot.slane %v832, 2
        %v834 = vmax.f32 %v832, %v833
        %v835 = vrot.slane %v834, 1
        %v836 = vmax.f32 %v834, %v835
        %v837 = vmax.f32 %v825, %v828
        %v838 = vrot.slane %v837, 4
        %v839 = vmax.f32 %v837, %v838
        %v840 = vrot.slane %v839, 2
        %v841 = vmax.f32 %v839, %v840
        %v842 = vrot.slane %v841, 1
        %v843 = vmax.f32 %v841, %v842
        %v844 = vsub.f32 %v802, %v836
        %v845 = vsub.f32 %v825, %v843
        %v846 = vsub.f32 %v805, %v836
        %v847 = vsub.f32 %v828, %v843
        %v848 = vmul.f32 %v844, 1.442695
        %v849 = vpow.pop %v848
        %v850 = vmul.f32 %v845, 1.442695
        %v851 = vpow.pop %v850
        %v852 = vmul.f32 %v846, 1.442695
        %v853 = vpow.pop %v852
        %v854 = vmul.f32 %v847, 1.442695
        %v855 = vpow.pop %v854
        %v856 = vadd.f32 %v849, %v853
        %v857 = vrot.slane %v856, 4
        %v858 = vadd.f32 %v856, %v857
        %v859 = vrot.slane %v858, 2
        %v860 = vadd.f32 %v858, %v859
        %v861 = vrot.slane %v860, 1
        %v862 = vadd.f32 %v860, %v861
        %v863 = vadd.f32 %v851, %v855
        %v864 = vrot.slane %v863, 4
        %v865 = vadd.f32 %v863, %v864
        %v866 = vrot.slane %v865, 2
        %v867 = vadd.f32 %v865, %v866
        %v868 = vrot.slane %v867, 1
        %v869 = vadd.f32 %v867, %v868
        %v870 = vrcp.pop %v862
        %v871 = vmul.f32 %v862, %v870
        %v872 = vsub.f32 1.0, %v871
        %v873 = vmul.f32 %v870, %v872
        %v874 = vadd.f32 %v870, %v873
        %vm875 = vweird.f32 %v862
        %vm876 = vweird.f32 %v870
        %vm877 = vmor %vm875, %vm876
        %v878 = vsel %vm877, %v870, %v874
        %v879 = vand.u32 2147483647, %v862
        %vm880 = vcmp.eq.f32.partialorder %v879, 8.507059e+37
        %v881 = vand.u32 %v862, 2147483648
        %v882 = vor.u32 1.1754944e-38, %v881
        %v883 = vsel %vm880, %v882, %v878
        %v884 = vrcp.pop %v869
        %v885 = vmul.f32 %v869, %v884
        %v886 = vsub.f32 1.0, %v885
        %v887 = vmul.f32 %v884, %v886
        %v888 = vadd.f32 %v884, %v887
        %vm889 = vweird.f32 %v869
        %vm890 = vweird.f32 %v884
        %vm891 = vmor %vm889, %vm890
        %v892 = vsel %vm891, %v884, %v888
        %v893 = vand.u32 2147483647, %v869
        %vm894 = vcmp.eq.f32.partialorder %v893, 8.507059e+37
        %v895 = vand.u32 %v869, 2147483648
        %v896 = vor.u32 1.1754944e-38, %v895
        %v897 = vsel %vm894, %v896, %v892
        %v898 = vmul.f32 %v849, %v883
        %v899 = vmul.f32 %v851, %v897
        %v900 = vmul.f32 %v853, %v883
        %v901 = vmul.f32 %v855, %v897
        %902 = vmatpush.xpose.msra.mxu0 %v782
        %903 = vmatpush.xpose.msra.mxu0 %v780
        %904 = vmatpush.xpose.msra.mxu0 %v778
        %905 = vmatpush.xpose.msra.mxu0 %v776
        %906 = vmatpush.xpose.msra.mxu0 %v774
        %907 = vmatpush.xpose.msra.mxu0 %v772
        %908 = vmatpush.xpose.msra.mxu0 %v770
        %909 = vmatpush.xpose.msra.mxu0 %v768
        %910 = vmatpush.xpose.msra.mxu0 %v766
        %911 = vmatpush.xpose.msra.mxu0 %v764
        %912 = vmatpush.xpose.msra.mxu0 %v762
        %913 = vmatpush.xpose.msra.mxu0 %v760
        %914 = vmatpush.xpose.msra.mxu0 %v758
        %915 = vmatpush.xpose.msra.mxu0 %v756
        %916 = vmatpush.xpose.msra.mxu0 %v754
        %917 = vmatpush.xpose.msra.mxu0 %v752
        %918 = vmatmul.f32.gmra.mxu0 %v898
        %v919 = vpop.f32.mrf.mxu0
        %v920 = vadd.f32 0.0, %v919
        %921 = vmatmul.f32.gmra.mxu0 %v900
        %v922 = vpop.f32.mrf.mxu0
        %v923 = vadd.f32 0.0, %v922
        %924 = vdwg.mxu0
        %925 = vmatpush.xpose.msra.mxu0 %v783
        %926 = vmatpush.xpose.msra.mxu0 %v781
        %927 = vmatpush.xpose.msra.mxu0 %v779
        %928 = vmatpush.xpose.msra.mxu0 %v777
        %929 = vmatpush.xpose.msra.mxu0 %v775
        %930 = vmatpush.xpose.msra.mxu0 %v773
        %931 = vmatpush.xpose.msra.mxu0 %v771
        %932 = vmatpush.xpose.msra.mxu0 %v769
        %933 = vmatpush.xpose.msra.mxu0 %v767
        %934 = vmatpush.xpose.msra.mxu0 %v765
        %935 = vmatpush.xpose.msra.mxu0 %v763
        %936 = vmatpush.xpose.msra.mxu0 %v761
        %937 = vmatpush.xpose.msra.mxu0 %v759
        %938 = vmatpush.xpose.msra.mxu0 %v757
        %939 = vmatpush.xpose.msra.mxu0 %v755
        %940 = vmatpush.xpose.msra.mxu0 %v753
        %941 = vmatmul.f32.gmra.mxu0 %v899
        %v942 = vpop.f32.mrf.mxu0
        %v943 = vadd.f32 %v920, %v942
        %944 = vmatmul.f32.gmra.mxu0 %v901
        %v945 = vpop.f32.mrf.mxu0
        %v946 = vadd.f32 %v923, %v945
        %947 = vdwg.mxu0
        %v948 = vadd.f32 %v898, %v899
        %949 = vadd.xlane.f32.xlu0 %v948
        %v950 = vpop.xlane.xlu0 %949
        %v951 = vadd.f32 %v900, %v901
        %952 = vadd.xlane.f32.xlu0 %v951
        %v953 = vpop.xlane.xlu0 %952
        %v954 = vmul.f32 %v229, %v950
        %v955 = vmul.f32 %v230, %v953
        %v956 = vsub.f32 %v943, %v954
        %v957 = vsub.f32 %v946, %v955
        %v958 = vmul.f32 %v956, %v956
        %v959 = vmul.f32 %v957, %v957
        %960 = vadd.xlane.f32.xlu0 %v958
        %v961 = vpop.xlane.xlu0 %960
        %962 = vadd.xlane.f32.xlu0 %v959
        %v963 = vpop.xlane.xlu0 %962
        %v964 = vmax.f32 %v961, 1e-24
        %v965 = vmax.f32 %v963, 1e-24
        %v966 = vrsqrt.pop %v964
        %v967 = vmul.f32 %v966, %v964
        %v968 = vmul.f32 %v967, %v966
        %v969 = vmul.f32 0.5, %v968
        %v970 = vsub.f32 1.5, %v969
        %v971 = vmul.f32 %v966, %v970
        %vm972 = vweird.f32 %v964
        %vm973 = vweird.f32 %v966
        %vm974 = vmor %vm972, %vm973
        %v975 = vsel %vm974, %v966, %v971
        %v976 = vrsqrt.pop %v965
        %v977 = vmul.f32 %v976, %v965
        %v978 = vmul.f32 %v977, %v976
        %v979 = vmul.f32 0.5, %v978
        %v980 = vsub.f32 1.5, %v979
        %v981 = vmul.f32 %v976, %v980
        %vm982 = vweird.f32 %v965
        %vm983 = vweird.f32 %v976
        %vm984 = vmor %vm982, %vm983
        %v985 = vsel %vm984, %v976, %v981
        %v986 = vmul.f32 %v956, %v975
        %v987 = vmul.f32 %v957, %v985
        %v988 = vmul.f32 %v986, %v986
        %v989 = vmul.f32 %v987, %v987
        %v990 = vadd.f32 %v988, %v989
        %991 = vadd.xlane.f32.xlu0 %v990
        %v992 = vpop.xlane.xlu0 %991
        %v993 = vrot.slane %v992, 4
        %v994 = vadd.f32 %v992, %v993
        %v995 = vrot.slane %v994, 2
        %v996 = vadd.f32 %v994, %v995
        %v997 = vrot.slane %v996, 1
        %v998 = vadd.f32 %v996, %v997
        %s999 = vtos %v998
        %v1000 = vstv %s999
        %v1001 = vmax.f32 %v1000, 1e-24
        %v1002 = vrsqrt.pop %v1001
        %v1003 = vmul.f32 %v1002, %v1001
        %v1004 = vmul.f32 %v1003, %v1002
        %v1005 = vmul.f32 0.5, %v1004
        %v1006 = vsub.f32 1.5, %v1005
        %v1007 = vmul.f32 %v1002, %v1006
        %vm1008 = vweird.f32 %v1001
        %vm1009 = vweird.f32 %v1002
        %vm1010 = vmor %vm1008, %vm1009
        %v1011 = vsel %vm1010, %v1002, %v1007
        %v1012 = vmul.f32 %v986, %v1011
        %v1013 = vmul.f32 %v987, %v1011
        %s1014 = scalar_lea.vmem %s224, 16 [#allocation8]
        %1015 = vst [vmem:[%s1014] sm:$0xff] %v1012
        %1016 = vst [vmem:[%s1014 + $0x8] sm:$0xff] %v1013
        %s1017 = sand.u32 %s97, 1
        %s1018 = scalar_lea.sflag [#allocation4], %s1017
        %s1019 = sand.u32 %s97, 1
        %s1020 = smul.addr %s1019, 32
        %s1021 = scalar_lea.vmem [#allocation8], %s1020
        // Predicated region
        $region45: #{tpu_custom_call.1} parent=31 // pred_check
          %p1022 = pneg %p107
        $region46: #{tpu_custom_call.1} parent=31 // pred_check_branch
          %1024 = sbr.rel (%p1022) target = $region48
        $region47: #{tpu_custom_call.1} parent=31 // pred_region
          %s1025 = smul.u32 2, %s21
          %1027 = vsyncadd %s1018, 0
          %s1028 = smul.addr %s1025, 2
          %s1029 = smul.addr %s1028, 8
          %s1030 = scalar_lea.hbm %s3, %s1029
          %s1031 = sshll.u32 %s1021, 4
          %s1032 = int_to_ptr.vmem [resolvable:$true] %s1031
          %s1033 = sshll.u32 %s1030, 4
          %s1034 = int_to_ptr.hbm [resolvable:$true] %s1033
          %1039 = dma.vmem_to_hbm [thread:$0]  %s1032, 512, %s1034, %s1018, 128, 128, 8
        $region48: #{tpu_custom_call.1} parent=31 // pred_fallthru
          _
      $region32: #{tpu_custom_call.1} parent=5 // pred_fallthru
        _
      %p1040 = scmp.le.s32.totalorder 2, %s16
      // Predicated region
      $region49: #{tpu_custom_call.1} parent=5 // pred_check
        %p1041 = pneg %p1040
      $region50: #{tpu_custom_call.1} parent=5 // pred_check_branch
        %1043 = sbr.rel (%p1041) target = $region52
      $region51: #{tpu_custom_call.1} parent=5 // pred_region
        %s1044 = ssub.s32 %s16, 2
        // Predicated region
        $region53: #{tpu_custom_call.1} parent=51 // pred_check
          %p1045 = pneg %p113
        $region54: #{tpu_custom_call.1} parent=51 // pred_check_branch
          %1047 = sbr.rel (%p1045) target = $region56
        $region55: #{tpu_custom_call.1} parent=51 // pred_region
          %s1048 = sand.u32 %s98, 1
          %s1049 = scalar_lea.sflag [#allocation4], %s1048
          %s1050 = sand.u32 %s98, 1
          %s1051 = smul.addr %s1050, 32
          %s1052 = scalar_lea.vmem [#allocation8], %s1051
          %1054 = dma.done %s1049, 512
        $region56: #{tpu_custom_call.1} parent=51 // pred_fallthru
          _
      $region52: #{tpu_custom_call.1} parent=5 // pred_fallthru
        _
    $region6: #{tpu_custom_call.1} parent=1 // loop_footer
      %s20 = sadd.s32 1, %s16
    $region7: #{tpu_custom_call.1} parent=1 // loop_footer_branch
      %15 = sbr.rel target = $region3
    $region8: #{tpu_custom_call.1} parent=1 // loop_exit
      _
    %1055 = vsyncpa [#allocation3], 1
    %s1056 = scalar_lea.sflag [#allocation3], 1
    %1057 = vsyncpa %s1056, 1
    %1058 = vsyncpa [#allocation6], 1
    %1059 = vsyncpa [#allocation4], 1
    %s1060 = scalar_lea.sflag [#allocation4], 1
    %1061 = vsyncpa %s1060, 1

</llo_original>
